<compile_context>
chip_gen: v5e
topology: v5e:2x2
jax: 0.10.0
libtpu: 0.0.40
codegen_flags: <defaults>
</compile_context>

<pallas_src>
import functools

import jax
import jax.numpy as jnp
from jax.experimental import pallas as pl
from jax.experimental.pallas import tpu as pltpu


def _head_kernel(x_ref, w_ref, b_ref, o_ref, *, slope):
    """Fused Linear + bias + LeakyReLU on one batch tile (f32 accumulation)."""
    # bf16 x / bf16 W on the MXU, f32 accumulation.
    h = jnp.dot(x_ref[...], w_ref[...], preferred_element_type=jnp.float32)
    h = h + b_ref[...].astype(jnp.float32)
    h = jnp.where(h > 0, h, slope * h)            # LeakyReLU in f32 (VPU)
    # Dropout == identity (eval mode).
    o_ref[...] = h.astype(o_ref.dtype)


def _round_up(v, m):
    return ((v + m - 1) // m) * m


def _choose_tile_n(n, in_dim, out_dim, x_itemsize, out_itemsize,
                   vmem_budget_bytes=12 << 20, max_tile_n=2048):
    """Batch tile from a VMEM budget (sized against v7x's 64 MiB VMEM / 32 MiB
    scoped default; v5e/v6e fit a fortiori).

    No forced multi-step split: this kernel is launch/memory bound, so a
    single grid step is optimal until the batch outgrows the budget (N beyond
    a couple thousand rows at bert_dim=768), at which point 512+-row tiles
    keep >=85% of HBM roofline and give v7x's two TensorCores real work.
    """
    per_row = (2 * in_dim * x_itemsize        # double-buffered x tile
               + 2 * out_dim * out_itemsize   # double-buffered out tile
               + out_dim * 4)                 # f32 intermediate
    tile_n = max(8, (vmem_budget_bytes // per_row) // 8 * 8)
    tile_n = min(tile_n, max_tile_n)
    tile_n = min(tile_n, _round_up(n, 8))     # never tile beyond the batch
    return tile_n


def text_encoder_head(x, w_t, b, *, leaky_slope, out_dtype=None, tile_n=None):
    """y = LeakyReLU(dropout(x @ w_t + b)); dropout is identity (eval mode).

    x   : [N, bert_dim]          (bf16 recommended -- MXU-native input)
    w_t : [bert_dim, commonDim]  (PyTorch linear1.weight TRANSPOSED, same dtype as x)
    b   : [1, commonDim] or [commonDim]  (f32)
    out : [N, commonDim] in `out_dtype` (defaults to x.dtype -> bf16 output
          halves the second-largest HBM stream; accumulation stays f32).
    """
    n, in_dim = x.shape
    if w_t.ndim != 2 or w_t.shape[0] != in_dim:
        raise ValueError(
            f"w_t must be [in_dim={in_dim}, out_dim] (PyTorch linear.weight "
            f"transposed); got shape {w_t.shape}")
    out_dim = w_t.shape[1]
    b = jnp.asarray(b).reshape(1, out_dim)
    if out_dtype is None:
        out_dtype = x.dtype

    if tile_n is None:
        tile_n = _choose_tile_n(n, in_dim, out_dim, x.dtype.itemsize,
                                jnp.dtype(out_dtype).itemsize)
    else:
        tile_n = max(8, _round_up(int(tile_n), 8))

    # Ragged last tile instead of a wrapper-side jnp.pad (which would re-read
    # and re-write all of x in HBM): Pallas masks OOB loads/stores of the
    # final partial block.
    grid = (pl.cdiv(n, tile_n),)
    kernel = functools.partial(_head_kernel, slope=leaky_slope)

    flops = 2 * n * in_dim * out_dim + 2 * n * out_dim
    bytes_accessed = int(x.size * x.dtype.itemsize
                         + w_t.size * w_t.dtype.itemsize
                         + b.size * b.dtype.itemsize
                         + n * out_dim * jnp.dtype(out_dtype).itemsize)

    def build(single_buffer_invariants):
        if single_buffer_invariants:
            # Constant index_map => the second pipeline buffer is dead weight.
            w_spec = pl.BlockSpec((in_dim, out_dim), lambda i: (0, 0),
                                  pipeline_mode=pl.Buffered(1))
            b_spec = pl.BlockSpec((1, out_dim), lambda i: (0, 0),
                                  pipeline_mode=pl.Buffered(1))
        else:
            w_spec = pl.BlockSpec((in_dim, out_dim), lambda i: (0, 0))
            b_spec = pl.BlockSpec((1, out_dim), lambda i: (0, 0))
        return pl.pallas_call(
            kernel,
            out_shape=jax.ShapeDtypeStruct((n, out_dim), out_dtype),
            grid_spec=pltpu.PrefetchScalarGridSpec(
                num_scalar_prefetch=0,
                grid=grid,
                in_specs=[
                    pl.BlockSpec((tile_n, in_dim), lambda i: (i, 0)),   # x tile
                    w_spec,                                             # W^T
                    b_spec,                                             # bias
                ],
                out_specs=pl.BlockSpec((tile_n, out_dim), lambda i: (i, 0)),
            ),
            compiler_params=pltpu.CompilerParams(
                dimension_semantics=("parallel",),
                vmem_limit_bytes=32 << 20,
            ),
            cost_estimate=pl.CostEstimate(
                flops=flops, transcendentals=0, bytes_accessed=bytes_accessed),
        )

    # Single-buffering the grid-invariant operands only matters when there is
    # more than one grid step; fall back to default specs if this Pallas
    # version rejects pl.Buffered(1).
    if grid[0] > 1:
        try:
            return build(True)(x, w_t, b)
        except Exception:
            pass
    return build(False)(x, w_t, b)


def _reference(x, w_t, b, slope):
    h = jnp.dot(x, w_t, preferred_element_type=jnp.float32) + b.astype(jnp.float32)
    return jnp.where(h > 0, h, slope * h)


if __name__ == "__main__":
    # TextEncoder head config (small test shapes; real model uses bert_dim=768).
    args = dict(bert_dim=256, model_commonDim=128, leakySlope=0.1, dropout=0.0)

    in_dim = args["bert_dim"]
    out_dim = args["model_commonDim"]
    slope = args["leakySlope"]

    key = jax.random.PRNGKey(0)
    kx, kw, kb, kx2 = jax.random.split(key, 4)

    scale = float(in_dim) ** -0.5
    # Stored as [in, out] == PyTorch linear1.weight transposed; bf16 = MXU-native.
    w_t = jax.random.uniform(kw, (in_dim, out_dim), jnp.float32,
                             -scale, scale).astype(jnp.bfloat16)
    b = jax.random.uniform(kb, (1, out_dim), jnp.float32, -scale, scale)

    # Case 1: small batch (not a multiple of 8) -> single grid step, ragged tile,
    # no wrapper-side padding. x stands in for words[1] (BERT pooled output).
    N = 12
    x = jax.random.normal(kx, (N, in_dim), jnp.float32).astype(jnp.bfloat16)
    out = jax.block_until_ready(text_encoder_head(x, w_t, b, leaky_slope=slope))
    ref = _reference(x, w_t, b, slope)
    assert out.shape == (N, out_dim) and out.dtype == x.dtype
    assert jnp.allclose(out.astype(jnp.float32), ref, atol=2e-2, rtol=2e-2), \
        "mismatch vs reference (case 1)"

    # Case 2: multi-step grid with a ragged last tile (20 rows, tile_n=8) to
    # exercise the single-buffered W/b path and OOB-masked edge stores.
    N2 = 20
    x2 = jax.random.normal(kx2, (N2, in_dim), jnp.float32).astype(jnp.bfloat16)
    out2 = jax.block_until_ready(
        text_encoder_head(x2, w_t, b, leaky_slope=slope, tile_n=8))
    ref2 = _reference(x2, w_t, b, slope)
    assert out2.shape == (N2, out_dim)
    assert jnp.allclose(out2.astype(jnp.float32), ref2, atol=2e-2, rtol=2e-2), \
        "mismatch vs reference (case 2)"

    print("KERNEL_OK")
</pallas_src>

<mosaic_0001>
module attributes {stable_mosaic.version = 11 : i64} {
  func.func @_head_kernel(%arg0: i32, %arg1: memref<16x256xbf16, #tpu.memory_space<vmem>>, %arg2: memref<256x128xbf16, #tpu.memory_space<vmem>>, %arg3: memref<1x128xf32, #tpu.memory_space<vmem>>, %arg4: memref<16x128xbf16, #tpu.memory_space<vmem>>) attributes {dimension_semantics = [#tpu.dimension_semantics<parallel>], iteration_bounds = array<i64: 1>, scalar_prefetch = 0 : i64, scratch_operands = 0 : i64, tpu.core_type = #tpu.core_type<tc>, window_params = [{transform_indices = @transform_0, window_bounds = array<i64: 16, 256>}, {pipeline_mode = #tpu.pipeline_mode<synchronous>, transform_indices = @transform_1, window_bounds = array<i64: 256, 128>}, {pipeline_mode = #tpu.pipeline_mode<synchronous>, transform_indices = @transform_2, window_bounds = array<i64: 1, 128>}, {transform_indices = @transform_3, window_bounds = array<i64: 16, 128>}]} {
    %c0 = arith.constant 0 : index
    %c0_0 = arith.constant 0 : index
    %0 = vector.load %arg1[%c0, %c0_0] : memref<16x256xbf16, #tpu.memory_space<vmem>>, vector<16x256xbf16>
    %c0_1 = arith.constant 0 : index
    %c0_2 = arith.constant 0 : index
    %1 = vector.load %arg2[%c0_1, %c0_2] : memref<256x128xbf16, #tpu.memory_space<vmem>>, vector<256x128xbf16>
    %cst = arith.constant dense<0.000000e+00> : vector<16x128xf32>
    %2 = tpu.matmul %0, %1, %cst {dimension_numbers = #tpu.dot_dimension_numbers<[1], [0], [0], [1], [0, 0, 1, 1], [], []>} : vector<16x256xbf16>, vector<256x128xbf16>, vector<16x128xf32> -> vector<16x128xf32>
    %c0_3 = arith.constant 0 : index
    %c0_4 = arith.constant 0 : index
    %3 = vector.load %arg3[%c0_3, %c0_4] : memref<1x128xf32, #tpu.memory_space<vmem>>, vector<1x128xf32>
    %4 = vector.broadcast %3 : vector<1x128xf32> to vector<16x128xf32>
    %5 = arith.addf %2, %4 : vector<16x128xf32>
    %cst_5 = arith.constant 0.000000e+00 : f32
    %6 = vector.broadcast %cst_5 : f32 to vector<16x128xf32>
    %7 = arith.cmpf ogt, %5, %6 : vector<16x128xf32>
    %cst_6 = arith.constant 1.000000e-01 : f32
    %8 = vector.broadcast %cst_6 : f32 to vector<16x128xf32>
    %9 = arith.mulf %8, %5 : vector<16x128xf32>
    %10 = arith.select %7, %5, %9 : vector<16x128xi1>, vector<16x128xf32>
    %11 = arith.truncf %10 : vector<16x128xf32> to vector<16x128xbf16>
    %c0_7 = arith.constant 0 : index
    %c0_8 = arith.constant 0 : index
    %12 = vector.load %arg4[%c0_7, %c0_8] : memref<16x128xbf16, #tpu.memory_space<vmem>>, vector<16x128xbf16>
    tpu.vector_store %arg4[%c0_7, %c0_8], %11 {strides = array<i32>} : memref<16x128xbf16, #tpu.memory_space<vmem>>, vector<16x128xbf16>,
    return
  }
  func.func @transform_0(%arg0: i32) -> (i32, i32) {
    %c0_i32 = arith.constant 0 : i32
    %c0_i32_0 = arith.constant 0 : i32
    return %arg0, %c0_i32 : i32, i32
  }
  func.func @transform_1(%arg0: i32) -> (i32, i32) {
    %c0_i32 = arith.constant 0 : i32
    %c0_i32_0 = arith.constant 0 : i32
    %c0_i32_1 = arith.constant 0 : i32
    return %c0_i32, %c0_i32_0 : i32, i32
  }
  func.func @transform_2(%arg0: i32) -> (i32, i32) {
    %c0_i32 = arith.constant 0 : i32
    %c0_i32_0 = arith.constant 0 : i32
    %c0_i32_1 = arith.constant 0 : i32
    return %c0_i32, %c0_i32_0 : i32, i32
  }
  func.func @transform_3(%arg0: i32) -> (i32, i32) {
    %c0_i32 = arith.constant 0 : i32
    %c0_i32_0 = arith.constant 0 : i32
    return %arg0, %c0_i32 : i32, i32
  }
}

</mosaic_0001>

<llo_original>
// kernel: tpu_custom_call.1
$region0: #{tpu_custom_call.1}
  #allocation0 [shape = 'u32[]', space=smem, size = 0x4, offset = 0x4, fixed_abs, tag = 'smem constant byte address 0x4 - core index']
  #allocation1 [shape = 'u32[72,128]{1,0:T(1,128)}', space=vmem, size = 0x9000, scoped, tag = 'internal scratch']
  %s0 = inlined_call_operand.hbm [shape: bf16[12,256], index: 0, kind: input, shape index: {}]
  %s1 = inlined_call_operand.hbm [shape: bf16[256,128], index: 1, kind: input, shape index: {}]
  %s2 = inlined_call_operand.vmem [shape: f32[1,128], index: 2, kind: input, shape index: {}]
  %s3 = inlined_call_operand.hbm [shape: bf16[12,128], index: 3, kind: output, shape index: {}]
  %s4 = sld [smem:[#allocation0]]
  $region30: #{tpu_custom_call.1} parent=0
    _
  %s6 = ssub.s32 1, %s4
  %s7 = scalar_select 0, %s6, %s4
  $region1: #{tpu_custom_call.1} parent=0
    #allocation2 [shape = 'u8[8192]{0}', space=vmem, size = 0x2000, scoped, tag = 'input window, operand 0, single buffered']
    #allocation3 [shape = 's32[1]{0}', space=sflag, size = 0x4, scoped, tag = 'scoped memory for tpu_custom_call.1']
    #allocation4 [shape = 's32[1]{0}', space=sflag, size = 0x4, scoped, tag = 'scoped memory for tpu_custom_call.1']
    #allocation5 [shape = 'u8[65536]{0}', space=vmem, size = 0x10000, scoped, tag = 'input window, operand 1, single buffered']
    #allocation6 [shape = 's32[1]{0}', space=sflag, size = 0x4, scoped, tag = 'scoped memory for tpu_custom_call.1']
    #allocation7 [shape = 'u8[4096]{0}', space=vmem, size = 0x1000, scoped, tag = 'output window, operand 0, single buffered']
    %8 = vsyncpa [#allocation3], 0
    %9 = vsyncpa [#allocation6], 0
    %10 = vsyncpa [#allocation4], 0
    // Predicated region
    $region2: #{tpu_custom_call.1} parent=1 // pred_check
      _
    $region3: #{tpu_custom_call.1} parent=1 // pred_check_branch
      %12 = sbr.rel (0) target = $region5
    $region4: #{tpu_custom_call.1} parent=1 // pred_region
      %14 = vsyncadd [#allocation3], 0
      %s15 = sshll.u32 %s0, 4
      %s16 = int_to_ptr.hbm [resolvable:$true] %s15
      %s17 = sshll.u32 [#allocation2], 4
      %s18 = int_to_ptr.vmem [resolvable:$true] %s17
      %23 = dma.hbm_to_vmem [thread:$0]  %s16, 256, %s18, [#allocation3], 128, 128, 8
    $region5: #{tpu_custom_call.1} parent=1 // pred_fallthru
      _
    // Predicated region
    $region6: #{tpu_custom_call.1} parent=1 // pred_check
      _
    $region7: #{tpu_custom_call.1} parent=1 // pred_check_branch
      %25 = sbr.rel (0) target = $region9
    $region8: #{tpu_custom_call.1} parent=1 // pred_region
      %27 = vsyncadd [#allocation6], 0
      %s28 = sshll.u32 %s1, 4
      %s29 = int_to_ptr.hbm [resolvable:$true] %s28
      %s30 = sshll.u32 [#allocation5], 4
      %s31 = int_to_ptr.vmem [resolvable:$true] %s30
      %36 = dma.hbm_to_vmem [thread:$0]  %s29, 2048, %s31, [#allocation6], 64, 64, 4
    $region9: #{tpu_custom_call.1} parent=1 // pred_fallthru
      _
    // Predicated region
    $region10: #{tpu_custom_call.1} parent=1 // pred_check
      _
    $region11: #{tpu_custom_call.1} parent=1 // pred_check_branch
      %38 = sbr.rel (0) target = $region13
    $region12: #{tpu_custom_call.1} parent=1 // pred_region
      _
    $region13: #{tpu_custom_call.1} parent=1 // pred_fallthru
      _
    // Predicated region
    $region14: #{tpu_custom_call.1} parent=1 // pred_check
      _
    $region15: #{tpu_custom_call.1} parent=1 // pred_check_branch
      %40 = sbr.rel (0) target = $region17
    $region16: #{tpu_custom_call.1} parent=1 // pred_region
      %42 = dma.done [#allocation3], 256
    $region17: #{tpu_custom_call.1} parent=1 // pred_fallthru
      _
    // Predicated region
    $region18: #{tpu_custom_call.1} parent=1 // pred_check
      _
    $region19: #{tpu_custom_call.1} parent=1 // pred_check_branch
      %44 = sbr.rel (0) target = $region21
    $region20: #{tpu_custom_call.1} parent=1 // pred_region
      %46 = dma.done [#allocation6], 2048
    $region21: #{tpu_custom_call.1} parent=1 // pred_fallthru
      _
    %v47 = vld [vmem:[#allocation2] sm:$0xff]
    %v48 = vld [vmem:[#allocation2 + $0x8] sm:$0xff]
    %v49 = vld [vmem:[#allocation5] sm:$0xf]
    %v50 = vld [vmem:[#allocation5 + $0x4] sm:$0xf]
    %v51 = vld [vmem:[#allocation5 + $0x8] sm:$0xf]
    %v52 = vld [vmem:[#allocation5 + $0xc] sm:$0xf]
    %v53 = vld [vmem:[#allocation5 + $0x10] sm:$0xf]
    %v54 = vld [vmem:[#allocation5 + $0x14] sm:$0xf]
    %v55 = vld [vmem:[#allocation5 + $0x18] sm:$0xf]
    %v56 = vld [vmem:[#allocation5 + $0x1c] sm:$0xf]
    %v57 = vld [vmem:[#allocation5 + $0x20] sm:$0xf]
    %v58 = vld [vmem:[#allocation5 + $0x24] sm:$0xf]
    %v59 = vld [vmem:[#allocation5 + $0x28] sm:$0xf]
    %v60 = vld [vmem:[#allocation5 + $0x2c] sm:$0xf]
    %v61 = vld [vmem:[#allocation5 + $0x30] sm:$0xf]
    %v62 = vld [vmem:[#allocation5 + $0x34] sm:$0xf]
    %v63 = vld [vmem:[#allocation5 + $0x38] sm:$0xf]
    %v64 = vld [vmem:[#allocation5 + $0x3c] sm:$0xf]
    %v65 = vld [vmem:[#allocation5 + $0x40] sm:$0xf]
    %v66 = vld [vmem:[#allocation5 + $0x44] sm:$0xf]
    %v67 = vld [vmem:[#allocation5 + $0x48] sm:$0xf]
    %v68 = vld [vmem:[#allocation5 + $0x4c] sm:$0xf]
    %v69 = vld [vmem:[#allocation5 + $0x50] sm:$0xf]
    %v70 = vld [vmem:[#allocation5 + $0x54] sm:$0xf]
    %v71 = vld [vmem:[#allocation5 + $0x58] sm:$0xf]
    %v72 = vld [vmem:[#allocation5 + $0x5c] sm:$0xf]
    %v73 = vld [vmem:[#allocation5 + $0x60] sm:$0xf]
    %v74 = vld [vmem:[#allocation5 + $0x64] sm:$0xf]
    %v75 = vld [vmem:[#allocation5 + $0x68] sm:$0xf]
    %v76 = vld [vmem:[#allocation5 + $0x6c] sm:$0xf]
    %v77 = vld [vmem:[#allocation5 + $0x70] sm:$0xf]
    %v78 = vld [vmem:[#allocation5 + $0x74] sm:$0xf]
    %v79 = vld [vmem:[#allocation5 + $0x78] sm:$0xf]
    %v80 = vld [vmem:[#allocation5 + $0x7c] sm:$0xf]
    %v81 = vld [vmem:[%s2] sm:$0x1]
    %v83 = vperm.slane %v81, 0
    %v87 = vunpack.c.l.b16 %v47
    %v88 = vunpack.c.h.b16 %v47
    %v89 = vunpack.c.l.b16 %v48
    %v90 = vunpack.c.h.b16 %v48
    %v91 = vpack.c.b16 %v89, %v87
    %v92 = vpack.c.b16 %v90, %v88
    %v127 = vunpack.c.l.b16 %v49
    %v128 = vunpack.c.l.b16 %v50
    %v129 = vunpack.c.l.b16 %v51
    %v130 = vunpack.c.l.b16 %v52
    %v131 = vunpack.c.l.b16 %v53
    %v132 = vunpack.c.l.b16 %v54
    %v133 = vunpack.c.l.b16 %v55
    %v134 = vunpack.c.l.b16 %v56
    %v135 = vunpack.c.l.b16 %v57
    %v136 = vunpack.c.l.b16 %v58
    %v137 = vunpack.c.l.b16 %v59
    %v138 = vunpack.c.l.b16 %v60
    %v139 = vunpack.c.l.b16 %v61
    %v140 = vunpack.c.l.b16 %v62
    %v141 = vunpack.c.l.b16 %v63
    %v142 = vunpack.c.l.b16 %v64
    %v143 = vunpack.c.l.b16 %v65
    %v144 = vunpack.c.l.b16 %v66
    %v145 = vunpack.c.l.b16 %v67
    %v146 = vunpack.c.l.b16 %v68
    %v147 = vunpack.c.l.b16 %v69
    %v148 = vunpack.c.l.b16 %v70
    %v149 = vunpack.c.l.b16 %v71
    %v150 = vunpack.c.l.b16 %v72
    %v151 = vunpack.c.l.b16 %v73
    %v152 = vunpack.c.l.b16 %v74
    %v153 = vunpack.c.l.b16 %v75
    %v154 = vunpack.c.l.b16 %v76
    %v155 = vunpack.c.l.b16 %v77
    %v156 = vunpack.c.l.b16 %v78
    %v157 = vunpack.c.l.b16 %v79
    %v158 = vunpack.c.l.b16 %v80
    %v159 = vpack.c.b16 %v128, %v127
    %v160 = vpack.c.b16 %v130, %v129
    %v161 = vpack.c.b16 %v132, %v131
    %v162 = vpack.c.b16 %v134, %v133
    %v163 = vpack.c.b16 %v136, %v135
    %v164 = vpack.c.b16 %v138, %v137
    %v165 = vpack.c.b16 %v140, %v139
    %v166 = vpack.c.b16 %v142, %v141
    %v167 = vpack.c.b16 %v144, %v143
    %v168 = vpack.c.b16 %v146, %v145
    %v169 = vpack.c.b16 %v148, %v147
    %v170 = vpack.c.b16 %v150, %v149
    %v171 = vpack.c.b16 %v152, %v151
    %v172 = vpack.c.b16 %v154, %v153
    %v173 = vpack.c.b16 %v156, %v155
    %v174 = vpack.c.b16 %v158, %v157
    %191 = vmatpush.bf16.msra.mxu0 %v166
    %192 = vmatpush.bf16.msra.mxu0 %v165
    %193 = vmatpush.bf16.msra.mxu0 %v164
    %194 = vmatpush.bf16.msra.mxu0 %v163
    %195 = vmatpush.bf16.msra.mxu0 %v162
    %196 = vmatpush.bf16.msra.mxu0 %v161
    %197 = vmatpush.bf16.msra.mxu0 %v160
    %198 = vmatpush.bf16.msra.mxu0 %v159
    %199 = vmatmul.bf16.gmra.mxu0 %v91
    %v200 = vpop.f32.mrf.mxu0
    %v201 = vadd.f32 %v83, %v200
    %v202 = vpop.f32.mrf.mxu0
    %v203 = vadd.f32 %v83, %v202
    %204 = vdwg.mxu0
    %205 = vmatpush.bf16.msra.mxu0 %v174
    %206 = vmatpush.bf16.msra.mxu0 %v173
    %207 = vmatpush.bf16.msra.mxu0 %v172
    %208 = vmatpush.bf16.msra.mxu0 %v171
    %209 = vmatpush.bf16.msra.mxu0 %v170
    %210 = vmatpush.bf16.msra.mxu0 %v169
    %211 = vmatpush.bf16.msra.mxu0 %v168
    %212 = vmatpush.bf16.msra.mxu0 %v167
    %213 = vmatmul.bf16.gmra.mxu0 %v92
    %v214 = vpop.f32.mrf.mxu0
    %v215 = vadd.f32 %v201, %v214
    %v216 = vpop.f32.mrf.mxu0
    %v217 = vadd.f32 %v203, %v216
    %218 = vdwg.mxu0
    %vm219 = vcmp.gt.f32.partialorder %v215, 0.0
    %vm220 = vcmp.gt.f32.partialorder %v217, 0.0
    %v221 = vmul.f32 %v215, 0.1
    %v222 = vmul.f32 %v217, 0.1
    %v223 = vsel %vm219, %v215, %v221
    %v224 = vsel %vm220, %v217, %v222
    %v225 = vpack.c.bf16 %v223, %v223
    %v226 = vpack.c.bf16 %v224, %v224
    %227 = vst [vmem:[#allocation7] sm:$0xf] %v225
    %228 = vst [vmem:[#allocation7 + $0x4] sm:$0xf] %v226
    // Predicated region
    $region22: #{tpu_custom_call.1} parent=1 // pred_check
      _
    $region23: #{tpu_custom_call.1} parent=1 // pred_check_branch
      %230 = sbr.rel (0) target = $region25
    $region24: #{tpu_custom_call.1} parent=1 // pred_region
      %232 = vsyncadd [#allocation4], 0
      %s233 = sshll.u32 [#allocation7], 4
      %s234 = int_to_ptr.vmem [resolvable:$true] %s233
      %s235 = sshll.u32 %s3, 4
      %s236 = int_to_ptr.hbm [resolvable:$true] %s235
      %241 = dma.vmem_to_hbm [thread:$0]  %s234, 128, %s236, [#allocation4], 64, 64, 4
    $region25: #{tpu_custom_call.1} parent=1 // pred_fallthru
      _
    // Predicated region
    $region26: #{tpu_custom_call.1} parent=1 // pred_check
      _
    $region27: #{tpu_custom_call.1} parent=1 // pred_check_branch
      %243 = sbr.rel (0) target = $region29
    $region28: #{tpu_custom_call.1} parent=1 // pred_region
      %245 = dma.done [#allocation4], 128
    $region29: #{tpu_custom_call.1} parent=1 // pred_fallthru
      _
    %246 = vsyncpa [#allocation3], 1
    %247 = vsyncpa [#allocation6], 1
    %248 = vsyncpa [#allocation4], 1

</llo_original>
